<compile_context>
chip_gen: v6e
topology: v6e:2x2x1
jax: 0.10.0
libtpu: 0.0.40
codegen_flags: <defaults>
</compile_context>

<pallas_src>
import functools

import numpy as np
import jax
import jax.numpy as jnp
from jax.experimental import pallas as pl
from jax.experimental.pallas import tpu as pltpu


def _softplus(x):
    # matches torch.nn.Softplus(beta=1, threshold=20)
    return jnp.where(x > 20.0, x, jnp.log(1.0 + jnp.exp(jnp.minimum(x, 20.0))))


def _cde_kernel(n_steps, t_chunk, total_steps,
                h0_ref, fhat0_ref, dyn_ref,
                w1t_ref, w1h_ref, b1_ref,
                w2_ref, b2_ref,
                w3_ref, b3_ref,
                ex_ref, rd_ref,
                out_ref,
                z_ref, zhat_ref, fhat_ref):
    n = pl.program_id(1)                      # time-chunk axis ("arbitrary")
    Bt, H = z_ref.shape

    # ---- hoisted (once per chunk): weight loads + bias broadcasts -----------
    w1t = jnp.broadcast_to(w1t_ref[...], (Bt, w1t_ref.shape[1]))
    w1h = w1h_ref[...]
    b1b = jnp.broadcast_to(b1_ref[...], (Bt, b1_ref.shape[1]))
    w2 = w2_ref[...]
    b2b = jnp.broadcast_to(b2_ref[...], (Bt, b2_ref.shape[1]))
    w3 = w3_ref[...]
    b3b = jnp.broadcast_to(b3_ref[...], (Bt, b3_ref.shape[1]))
    ex = ex_ref[...]                           # (C, H*C)  dy -> per-column dy
    rd = rd_ref[...]                           # (H*C, H)  sum over channel c

    def drift(t_scalar, h, dy):
        # MLP([t, h]): first layer split so no concat is needed:
        #   [t, h] @ W1 == t * W1[0:1, :] + h @ W1[1:, :]
        x = t_scalar * w1t + jnp.dot(h, w1h, preferred_element_type=jnp.float32) + b1b
        x = _softplus(x)
        x = jnp.dot(x, w2, preferred_element_type=jnp.float32) + b2b
        x = _softplus(x)
        x = jnp.tanh(jnp.dot(x, w3, preferred_element_type=jnp.float32) + b3b)
        # x columns are torch .view(B, H, 1+dim) layout: col = h*C + c.
        # contract vf[b,h,c] with dy[b,c] over c via two 0/1 matmuls (MXU):
        dy_exp = jnp.dot(dy, ex, preferred_element_type=jnp.float32)      # (Bt, H*C)
        return jnp.dot(x * dy_exp, rd, preferred_element_type=jnp.float32)  # (Bt, H)

    # ---- chunk 0: load hoisted initial state (h0, fhat0 computed in wrapper)
    @pl.when(n == 0)
    def _():
        z_ref[...] = h0_ref[...]
        zhat_ref[...] = h0_ref[...]
        fhat_ref[...] = fhat0_ref[...]

    base = n * t_chunk

    def step(s, carry):
        z, zhat, fhat = carry
        dy = dyn_ref[s]                        # (Bt, C), dY over [t_g, t_{g+1}]
        # reversible Heun (torchsde 'reversible_heun'), dt = 1, zero diffusion
        zhat_new = 2.0 * z - zhat + fhat
        t_next = (base + s + 1).astype(jnp.float32)
        fhat_new = drift(t_next, zhat_new, dy)
        z_new = z + 0.5 * (fhat + fhat_new)
        if total_steps > n_steps:              # static: only if dyn was padded
            valid = (base + s) < n_steps
            z_new = jnp.where(valid, z_new, z)
            zhat_new = jnp.where(valid, zhat_new, zhat)
            fhat_new = jnp.where(valid, fhat_new, fhat)
        return z_new, zhat_new, fhat_new

    z, zhat, fhat = jax.lax.fori_loop(
        0, t_chunk, step, (z_ref[...], zhat_ref[...], fhat_ref[...]))

    # persist state across chunks (one load + one store per chunk, not per step)
    z_ref[...] = z
    zhat_ref[...] = zhat
    fhat_ref[...] = fhat

    @pl.when(n == pl.num_programs(1) - 1)
    def _():
        out_ref[...] = z                       # readout applied in the wrapper


def cde_forward_pallas(ys_coeffs, params, *, t_chunk=128, b_tile=None):
    wi, bi, w1, b1, w2, b2, w3, b3, wr, br = params
    B, L, C = ys_coeffs.shape
    H = wi.shape[1]
    D1 = w1.shape[1]
    D2 = w2.shape[1]
    HC = w3.shape[1]                           # == H * C
    n_steps = L - 1

    if b_tile is None:
        b_tile = B                             # split only for large batches
    assert B % b_tile == 0
    nb = B // b_tile

    T = max(1, min(t_chunk, n_steps))          # chunk of time steps per grid iter
    num_chunks = pl.cdiv(n_steps, T)
    total_steps = num_chunks * T

    # ---- glue: control increments, initial state, constant contraction mats -
    y0 = ys_coeffs[:, 0, :]                                             # (B, C)
    dyn = jnp.transpose(ys_coeffs[:, 1:, :] - ys_coeffs[:, :-1, :],
                        (1, 0, 2))                                      # (n_steps, B, C)
    dy0 = dyn[0]                                                        # (B, C)
    if total_steps > n_steps:
        dyn = jnp.pad(dyn, ((0, total_steps - n_steps), (0, 0), (0, 0)))

    w1t = w1[0:1, :]                           # time row of MLP layer 1
    w1h = w1[1:, :]                            # hidden-state rows of layer 1

    # Ex[c, h*C + c] = 1 ; Rd[h*C + c, h] = 1   (torch .view(B, H, 1+dim) layout)
    ex = jnp.tile(jnp.eye(C, dtype=jnp.float32), (1, H))                # (C, HC)
    rd = jnp.repeat(jnp.eye(H, dtype=jnp.float32), C, axis=0)           # (HC, H)

    # hoisted one-off ops: h0, initial drift (dY(t0) clamps to dY over [t0,t1])
    h0 = y0 @ wi + bi                                                   # (B, H)

    def drift_host(t, h, dy):
        th = jnp.concatenate([jnp.full((B, 1), t, jnp.float32), h], axis=1)
        x = _softplus(th @ w1 + b1)
        x = _softplus(x @ w2 + b2)
        x = jnp.tanh(x @ w3 + b3)
        vf = x.reshape(B, H, C)
        return jnp.sum(vf * dy[:, None, :], axis=-1)

    fhat0 = drift_host(0.0, h0, dy0)                                    # (B, H)

    def const_spec(shape):
        nd = len(shape)
        return pl.BlockSpec(tuple(shape), lambda b, n, _nd=nd: (0,) * _nd)

    in_specs = [
        pl.BlockSpec((b_tile, H), lambda b, n: (b, 0)),      # h0
        pl.BlockSpec((b_tile, H), lambda b, n: (b, 0)),      # fhat0
        pl.BlockSpec((T, b_tile, C), lambda b, n: (n, b, 0)),  # dY chunk
        const_spec(w1t.shape), const_spec(w1h.shape), const_spec(b1.shape),
        const_spec(w2.shape), const_spec(b2.shape),
        const_spec(w3.shape), const_spec(b3.shape),
        const_spec(ex.shape), const_spec(rd.shape),
    ]

    h_final = pl.pallas_call(
        functools.partial(_cde_kernel, n_steps, T, total_steps),
        out_shape=jax.ShapeDtypeStruct((B, H), jnp.float32),
        grid_spec=pltpu.PrefetchScalarGridSpec(
            num_scalar_prefetch=0,
            grid=(nb, num_chunks),
            in_specs=in_specs,
            out_specs=pl.BlockSpec((b_tile, H), lambda b, n: (b, 0)),
            scratch_shapes=[pltpu.VMEM((b_tile, H), jnp.float32),   # z
                            pltpu.VMEM((b_tile, H), jnp.float32),   # z_hat
                            pltpu.VMEM((b_tile, H), jnp.float32)],  # f_hat
        ),
        compiler_params=pltpu.CompilerParams(
            dimension_semantics=("parallel", "arbitrary")),
    )(h0, fhat0, dyn, w1t, w1h, b1, w2, b2, w3, b3, ex, rd)

    # hoisted readout (one-off XLA matmul)
    return h_final @ wr + br


def cde_forward_reference(ys_coeffs, params):
    """Pure-JAX reference with torch layout conventions (for verification)."""
    wi, bi, w1, b1, w2, b2, w3, b3, wr, br = params
    B, L, C = ys_coeffs.shape
    H = wi.shape[1]

    def drift(t, h, dy):
        th = jnp.concatenate([jnp.full((B, 1), t, jnp.float32), h], axis=1)
        x = _softplus(th @ w1 + b1)
        x = _softplus(x @ w2 + b2)
        x = jnp.tanh(x @ w3 + b3)
        vf = x.reshape(B, H, C)                 # torch .view(B, hidden, 1+dim)
        return jnp.sum(vf * dy[:, None, :], axis=-1)

    h0 = ys_coeffs[:, 0, :] @ wi + bi
    z = h0
    zhat = h0
    fhat = drift(0.0, h0, ys_coeffs[:, 1] - ys_coeffs[:, 0])
    for n in range(L - 1):
        dy = ys_coeffs[:, n + 1] - ys_coeffs[:, n]
        zhat_new = 2.0 * z - zhat + fhat
        fhat_new = drift(float(n + 1), zhat_new, dy)
        z = z + 0.5 * (fhat + fhat_new)
        zhat, fhat = zhat_new, fhat_new
    return z @ wr + br


def _linear_init(key, fan_in, fan_out):
    kw, kb = jax.random.split(key)
    bound = 1.0 / np.sqrt(fan_in)
    w = jax.random.uniform(kw, (fan_in, fan_out), jnp.float32, -bound, bound)
    b = jax.random.uniform(kb, (1, fan_out), jnp.float32, -bound, bound)
    return w, b


def init_params(key, dim, hidden_dims, hidden_state_dim, out_dim):
    assert len(hidden_dims) == 2, "kernel is wired for two hidden MLP layers"
    C = 1 + dim
    H = hidden_state_dim
    k = jax.random.split(key, 5)
    wi, bi = _linear_init(k[0], C, H)                    # self._initial
    w1, b1 = _linear_init(k[1], 1 + H, hidden_dims[0])   # MLP layer 1
    w2, b2 = _linear_init(k[2], hidden_dims[0], hidden_dims[1])
    w3, b3 = _linear_init(k[3], hidden_dims[1], H * C)   # MLP output -> (H, 1+dim)
    wr, br = _linear_init(k[4], H, out_dim)              # self._readout
    return (wi, bi, w1, b1, w2, b2, w3, b3, wr, br)


if __name__ == "__main__":
    B, L = 4, 8          # batch, sequence length (interpolation knots)
    dim = 3              # data dim -> channels C = 1 + dim = 4
    H = 16               # hidden_state_dim
    hidden_dims = (32, 32)
    out_dim = 4

    key = jax.random.PRNGKey(0)
    k_x, k_p = jax.random.split(key)
    ys_coeffs = jax.random.normal(k_x, (B, L, 1 + dim), jnp.float32)
    params = init_params(k_p, dim, hidden_dims, H, out_dim)

    out = jax.jit(cde_forward_pallas)(ys_coeffs, params)
    out = jax.block_until_ready(out)

    ref = cde_forward_reference(ys_coeffs, params)
    np.testing.assert_allclose(np.asarray(out), np.asarray(ref),
                               rtol=1e-2, atol=1e-2)
    print("KERNEL_OK")
</pallas_src>

<mosaic_0001>
module attributes {stable_mosaic.version = 11 : i64} {
  func.func @_cde_kernel(%arg0: i32, %arg1: i32, %arg2: memref<4x16xf32, #tpu.memory_space<vmem>>, %arg3: memref<4x16xf32, #tpu.memory_space<vmem>>, %arg4: memref<7x4x4xf32, #tpu.memory_space<vmem>>, %arg5: memref<1x32xf32, #tpu.memory_space<vmem>>, %arg6: memref<16x32xf32, #tpu.memory_space<vmem>>, %arg7: memref<1x32xf32, #tpu.memory_space<vmem>>, %arg8: memref<32x32xf32, #tpu.memory_space<vmem>>, %arg9: memref<1x32xf32, #tpu.memory_space<vmem>>, %arg10: memref<32x64xf32, #tpu.memory_space<vmem>>, %arg11: memref<1x64xf32, #tpu.memory_space<vmem>>, %arg12: memref<4x64xf32, #tpu.memory_space<vmem>>, %arg13: memref<64x16xf32, #tpu.memory_space<vmem>>, %arg14: memref<4x16xf32, #tpu.memory_space<vmem>>, %arg15: memref<4x16xf32, #tpu.memory_space<vmem>>, %arg16: memref<4x16xf32, #tpu.memory_space<vmem>>, %arg17: memref<4x16xf32, #tpu.memory_space<vmem>>) attributes {dimension_semantics = [#tpu.dimension_semantics<parallel>, #tpu.dimension_semantics<arbitrary>], iteration_bounds = array<i64: 1, 1>, scalar_prefetch = 0 : i64, scratch_operands = 3 : i64, tpu.core_type = #tpu.core_type<tc>, window_params = [{transform_indices = @transform_0, window_bounds = array<i64: 4, 16>}, {transform_indices = @transform_1, window_bounds = array<i64: 4, 16>}, {transform_indices = @transform_2, window_bounds = array<i64: 7, 4, 4>}, {pipeline_mode = #tpu.pipeline_mode<synchronous>, transform_indices = @transform_3, window_bounds = array<i64: 1, 32>}, {pipeline_mode = #tpu.pipeline_mode<synchronous>, transform_indices = @transform_4, window_bounds = array<i64: 16, 32>}, {pipeline_mode = #tpu.pipeline_mode<synchronous>, transform_indices = @transform_5, window_bounds = array<i64: 1, 32>}, {pipeline_mode = #tpu.pipeline_mode<synchronous>, transform_indices = @transform_6, window_bounds = array<i64: 32, 32>}, {pipeline_mode = #tpu.pipeline_mode<synchronous>, transform_indices = @transform_7, window_bounds = array<i64: 1, 32>}, {pipeline_mode = #tpu.pipeline_mode<synchronous>, transform_indices = @transform_8, window_bounds = array<i64: 32, 64>}, {pipeline_mode = #tpu.pipeline_mode<synchronous>, transform_indices = @transform_9, window_bounds = array<i64: 1, 64>}, {pipeline_mode = #tpu.pipeline_mode<synchronous>, transform_indices = @transform_10, window_bounds = array<i64: 4, 64>}, {pipeline_mode = #tpu.pipeline_mode<synchronous>, transform_indices = @transform_11, window_bounds = array<i64: 64, 16>}, {transform_indices = @transform_12, window_bounds = array<i64: 4, 16>}]} {
    %c0 = arith.constant 0 : index
    %c0_0 = arith.constant 0 : index
    %0 = vector.load %arg5[%c0, %c0_0] : memref<1x32xf32, #tpu.memory_space<vmem>>, vector<1x32xf32>
    %1 = vector.shape_cast %0 : vector<1x32xf32> to vector<1x32xf32>
    %2 = vector.broadcast %1 : vector<1x32xf32> to vector<4x32xf32>
    %c0_1 = arith.constant 0 : index
    %c0_2 = arith.constant 0 : index
    %3 = vector.load %arg6[%c0_1, %c0_2] : memref<16x32xf32, #tpu.memory_space<vmem>>, vector<16x32xf32>
    %c0_3 = arith.constant 0 : index
    %c0_4 = arith.constant 0 : index
    %4 = vector.load %arg7[%c0_3, %c0_4] : memref<1x32xf32, #tpu.memory_space<vmem>>, vector<1x32xf32>
    %5 = vector.shape_cast %4 : vector<1x32xf32> to vector<1x32xf32>
    %6 = vector.broadcast %5 : vector<1x32xf32> to vector<4x32xf32>
    %c0_5 = arith.constant 0 : index
    %c0_6 = arith.constant 0 : index
    %7 = vector.load %arg8[%c0_5, %c0_6] : memref<32x32xf32, #tpu.memory_space<vmem>>, vector<32x32xf32>
    %c0_7 = arith.constant 0 : index
    %c0_8 = arith.constant 0 : index
    %8 = vector.load %arg9[%c0_7, %c0_8] : memref<1x32xf32, #tpu.memory_space<vmem>>, vector<1x32xf32>
    %9 = vector.shape_cast %8 : vector<1x32xf32> to vector<1x32xf32>
    %10 = vector.broadcast %9 : vector<1x32xf32> to vector<4x32xf32>
    %c0_9 = arith.constant 0 : index
    %c0_10 = arith.constant 0 : index
    %11 = vector.load %arg10[%c0_9, %c0_10] : memref<32x64xf32, #tpu.memory_space<vmem>>, vector<32x64xf32>
    %c0_11 = arith.constant 0 : index
    %c0_12 = arith.constant 0 : index
    %12 = vector.load %arg11[%c0_11, %c0_12] : memref<1x64xf32, #tpu.memory_space<vmem>>, vector<1x64xf32>
    %13 = vector.shape_cast %12 : vector<1x64xf32> to vector<1x64xf32>
    %14 = vector.broadcast %13 : vector<1x64xf32> to vector<4x64xf32>
    %c0_13 = arith.constant 0 : index
    %c0_14 = arith.constant 0 : index
    %15 = vector.load %arg12[%c0_13, %c0_14] : memref<4x64xf32, #tpu.memory_space<vmem>>, vector<4x64xf32>
    %c0_15 = arith.constant 0 : index
    %c0_16 = arith.constant 0 : index
    %16 = vector.load %arg13[%c0_15, %c0_16] : memref<64x16xf32, #tpu.memory_space<vmem>>, vector<64x16xf32>
    %c0_i32 = arith.constant 0 : i32
    %17 = arith.cmpi eq, %arg1, %c0_i32 : i32
    %18 = arith.extui %17 : i1 to i32
    %c0_i32_17 = arith.constant 0 : i32
    %19 = arith.cmpi ne, %18, %c0_i32_17 : i32
    scf.if %19 {
      %c0_35 = arith.constant 0 : index
      %c0_36 = arith.constant 0 : index
      %32 = vector.load %arg2[%c0_35, %c0_36] : memref<4x16xf32, #tpu.memory_space<vmem>>, vector<4x16xf32>
      %c0_37 = arith.constant 0 : index
      %c0_38 = arith.constant 0 : index
      %33 = vector.load %arg15[%c0_37, %c0_38] : memref<4x16xf32, #tpu.memory_space<vmem>>, vector<4x16xf32>
      tpu.vector_store %arg15[%c0_37, %c0_38], %32 {strides = array<i32>} : memref<4x16xf32, #tpu.memory_space<vmem>>, vector<4x16xf32>,
      %c0_39 = arith.constant 0 : index
      %c0_40 = arith.constant 0 : index
      %34 = vector.load %arg2[%c0_39, %c0_40] : memref<4x16xf32, #tpu.memory_space<vmem>>, vector<4x16xf32>
      %c0_41 = arith.constant 0 : index
      %c0_42 = arith.constant 0 : index
      %35 = vector.load %arg16[%c0_41, %c0_42] : memref<4x16xf32, #tpu.memory_space<vmem>>, vector<4x16xf32>
      tpu.vector_store %arg16[%c0_41, %c0_42], %34 {strides = array<i32>} : memref<4x16xf32, #tpu.memory_space<vmem>>, vector<4x16xf32>,
      %c0_43 = arith.constant 0 : index
      %c0_44 = arith.constant 0 : index
      %36 = vector.load %arg3[%c0_43, %c0_44] : memref<4x16xf32, #tpu.memory_space<vmem>>, vector<4x16xf32>
      %c0_45 = arith.constant 0 : index
      %c0_46 = arith.constant 0 : index
      %37 = vector.load %arg17[%c0_45, %c0_46] : memref<4x16xf32, #tpu.memory_space<vmem>>, vector<4x16xf32>
      tpu.vector_store %arg17[%c0_45, %c0_46], %36 {strides = array<i32>} : memref<4x16xf32, #tpu.memory_space<vmem>>, vector<4x16xf32>,
    } else {
    }
    %c7_i32 = arith.constant 7 : i32
    %20 = arith.muli %arg1, %c7_i32 : i32
    %c0_18 = arith.constant 0 : index
    %c0_19 = arith.constant 0 : index
    %21 = vector.load %arg15[%c0_18, %c0_19] : memref<4x16xf32, #tpu.memory_space<vmem>>, vector<4x16xf32>
    %c0_20 = arith.constant 0 : index
    %c0_21 = arith.constant 0 : index
    %22 = vector.load %arg16[%c0_20, %c0_21] : memref<4x16xf32, #tpu.memory_space<vmem>>, vector<4x16xf32>
    %c0_22 = arith.constant 0 : index
    %c0_23 = arith.constant 0 : index
    %23 = vector.load %arg17[%c0_22, %c0_23] : memref<4x16xf32, #tpu.memory_space<vmem>>, vector<4x16xf32>
    %c0_i32_24 = arith.constant 0 : i32
    %c7_i32_25 = arith.constant 7 : i32
    %24 = arith.addi %c0_i32_24, %c7_i32_25 : i32
    %c1_i32 = arith.constant 1 : i32
    %25:3 = scf.for %arg18 = %c0_i32_24 to %24 step %c1_i32 iter_args(%arg19 = %21, %arg20 = %22, %arg21 = %23) -> (vector<4x16xf32>, vector<4x16xf32>, vector<4x16xf32>)  : i32 {
      %32 = arith.index_cast %arg18 : i32 to index
      %c0_35 = arith.constant 0 : index
      %c0_36 = arith.constant 0 : index
      %33 = vector.load %arg4[%32, %c0_35, %c0_36] : memref<7x4x4xf32, #tpu.memory_space<vmem>>, vector<1x4x4xf32>
      %34 = vector.shape_cast %33 : vector<1x4x4xf32> to vector<4x4xf32>
      %cst = arith.constant 2.000000e+00 : f32
      %35 = vector.broadcast %cst : f32 to vector<4x16xf32>
      %36 = arith.mulf %35, %arg19 : vector<4x16xf32>
      %37 = arith.subf %36, %arg20 : vector<4x16xf32>
      %38 = arith.addf %37, %arg21 : vector<4x16xf32>
      %39 = arith.addi %20, %arg18 : i32
      %c1_i32_37 = arith.constant 1 : i32
      %40 = arith.addi %39, %c1_i32_37 : i32
      %41 = arith.sitofp %40 : i32 to f32
      %42 = vector.broadcast %41 : f32 to vector<4x32xf32>
      %43 = arith.mulf %42, %2 : vector<4x32xf32>
      %cst_38 = arith.constant dense<0.000000e+00> : vector<4x32xf32>
      %44 = tpu.matmul %38, %3, %cst_38 {dimension_numbers = #tpu.dot_dimension_numbers<[1], [0], [0], [1], [0, 0, 1, 1], [], []>} : vector<4x16xf32>, vector<16x32xf32>, vector<4x32xf32> -> vector<4x32xf32>
      %45 = arith.addf %43, %44 : vector<4x32xf32>
      %46 = arith.addf %45, %6 : vector<4x32xf32>
      %cst_39 = arith.constant 2.000000e+01 : f32
      %47 = vector.broadcast %cst_39 : f32 to vector<4x32xf32>
      %48 = arith.cmpf ogt, %46, %47 : vector<4x32xf32>
      %cst_40 = arith.constant 2.000000e+01 : f32
      %49 = vector.broadcast %cst_40 : f32 to vector<4x32xf32>
      %50 = arith.minimumf %46, %49 : vector<4x32xf32>
      %51 = math.exp %50 : vector<4x32xf32>
      %cst_41 = arith.constant 1.000000e+00 : f32
      %52 = vector.broadcast %cst_41 : f32 to vector<4x32xf32>
      %53 = arith.addf %52, %51 : vector<4x32xf32>
      %54 = math.log %53 : vector<4x32xf32>
      %55 = arith.select %48, %46, %54 : vector<4x32xi1>, vector<4x32xf32>
      %cst_42 = arith.constant dense<0.000000e+00> : vector<4x32xf32>
      %56 = tpu.matmul %55, %7, %cst_42 {dimension_numbers = #tpu.dot_dimension_numbers<[1], [0], [0], [1], [0, 0, 1, 1], [], []>} : vector<4x32xf32>, vector<32x32xf32>, vector<4x32xf32> -> vector<4x32xf32>
      %57 = arith.addf %56, %10 : vector<4x32xf32>
      %cst_43 = arith.constant 2.000000e+01 : f32
      %58 = vector.broadcast %cst_43 : f32 to vector<4x32xf32>
      %59 = arith.cmpf ogt, %57, %58 : vector<4x32xf32>
      %cst_44 = arith.constant 2.000000e+01 : f32
      %60 = vector.broadcast %cst_44 : f32 to vector<4x32xf32>
      %61 = arith.minimumf %57, %60 : vector<4x32xf32>
      %62 = math.exp %61 : vector<4x32xf32>
      %cst_45 = arith.constant 1.000000e+00 : f32
      %63 = vector.broadcast %cst_45 : f32 to vector<4x32xf32>
      %64 = arith.addf %63, %62 : vector<4x32xf32>
      %65 = math.log %64 : vector<4x32xf32>
      %66 = arith.select %59, %57, %65 : vector<4x32xi1>, vector<4x32xf32>
      %cst_46 = arith.constant dense<0.000000e+00> : vector<4x64xf32>
      %67 = tpu.matmul %66, %11, %cst_46 {dimension_numbers = #tpu.dot_dimension_numbers<[1], [0], [0], [1], [0, 0, 1, 1], [], []>} : vector<4x32xf32>, vector<32x64xf32>, vector<4x64xf32> -> vector<4x64xf32>
      %68 = arith.addf %67, %14 : vector<4x64xf32>
      %69 = math.tanh %68 : vector<4x64xf32>
      %cst_47 = arith.constant dense<0.000000e+00> : vector<4x64xf32>
      %70 = tpu.matmul %34, %15, %cst_47 {dimension_numbers = #tpu.dot_dimension_numbers<[1], [0], [0], [1], [0, 0, 1, 1], [], []>} : vector<4x4xf32>, vector<4x64xf32>, vector<4x64xf32> -> vector<4x64xf32>
      %71 = arith.mulf %69, %70 : vector<4x64xf32>
      %cst_48 = arith.constant dense<0.000000e+00> : vector<4x16xf32>
      %72 = tpu.matmul %71, %16, %cst_48 {dimension_numbers = #tpu.dot_dimension_numbers<[1], [0], [0], [1], [0, 0, 1, 1], [], []>} : vector<4x64xf32>, vector<64x16xf32>, vector<4x16xf32> -> vector<4x16xf32>
      %73 = arith.addf %arg21, %72 : vector<4x16xf32>
      %cst_49 = arith.constant 5.000000e-01 : f32
      %74 = vector.broadcast %cst_49 : f32 to vector<4x16xf32>
      %75 = arith.mulf %74, %73 : vector<4x16xf32>
      %76 = arith.addf %arg19, %75 : vector<4x16xf32>
      scf.yield %76, %38, %72 : vector<4x16xf32>, vector<4x16xf32>, vector<4x16xf32>
    }
    %c7_i32_26 = arith.constant 7 : i32
    %c0_27 = arith.constant 0 : index
    %c0_28 = arith.constant 0 : index
    %26 = vector.load %arg15[%c0_27, %c0_28] : memref<4x16xf32, #tpu.memory_space<vmem>>, vector<4x16xf32>
    tpu.vector_store %arg15[%c0_27, %c0_28], %25#0 {strides = array<i32>} : memref<4x16xf32, #tpu.memory_space<vmem>>, vector<4x16xf32>,
    %c0_29 = arith.constant 0 : index
    %c0_30 = arith.constant 0 : index
    %27 = vector.load %arg16[%c0_29, %c0_30] : memref<4x16xf32, #tpu.memory_space<vmem>>, vector<4x16xf32>
    tpu.vector_store %arg16[%c0_29, %c0_30], %25#1 {strides = array<i32>} : memref<4x16xf32, #tpu.memory_space<vmem>>, vector<4x16xf32>,
    %c0_31 = arith.constant 0 : index
    %c0_32 = arith.constant 0 : index
    %28 = vector.load %arg17[%c0_31, %c0_32] : memref<4x16xf32, #tpu.memory_space<vmem>>, vector<4x16xf32>
    tpu.vector_store %arg17[%c0_31, %c0_32], %25#2 {strides = array<i32>} : memref<4x16xf32, #tpu.memory_space<vmem>>, vector<4x16xf32>,
    %c0_i32_33 = arith.constant 0 : i32
    %29 = arith.cmpi eq, %arg1, %c0_i32_33 : i32
    %30 = arith.extui %29 : i1 to i32
    %c0_i32_34 = arith.constant 0 : i32
    %31 = arith.cmpi ne, %30, %c0_i32_34 : i32
    scf.if %31 {
      %c0_35 = arith.constant 0 : index
      %c0_36 = arith.constant 0 : index
      %32 = vector.load %arg14[%c0_35, %c0_36] : memref<4x16xf32, #tpu.memory_space<vmem>>, vector<4x16xf32>
      tpu.vector_store %arg14[%c0_35, %c0_36], %25#0 {strides = array<i32>} : memref<4x16xf32, #tpu.memory_space<vmem>>, vector<4x16xf32>,
    } else {
    }
    return
  }
  func.func @transform_0(%arg0: i32, %arg1: i32) -> (i32, i32) {
    %c0_i32 = arith.constant 0 : i32
    %c0_i32_0 = arith.constant 0 : i32
    return %arg0, %c0_i32 : i32, i32
  }
  func.func @transform_1(%arg0: i32, %arg1: i32) -> (i32, i32) {
    %c0_i32 = arith.constant 0 : i32
    %c0_i32_0 = arith.constant 0 : i32
    return %arg0, %c0_i32 : i32, i32
  }
  func.func @transform_2(%arg0: i32, %arg1: i32) -> (i32, i32, i32) {
    %c0_i32 = arith.constant 0 : i32
    %c0_i32_0 = arith.constant 0 : i32
    return %arg1, %arg0, %c0_i32 : i32, i32, i32
  }
  func.func @transform_3(%arg0: i32, %arg1: i32) -> (i32, i32) {
    %c0_i32 = arith.constant 0 : i32
    %c0_i32_0 = arith.constant 0 : i32
    %c0_i32_1 = arith.constant 0 : i32
    return %c0_i32, %c0_i32_0 : i32, i32
  }
  func.func @transform_4(%arg0: i32, %arg1: i32) -> (i32, i32) {
    %c0_i32 = arith.constant 0 : i32
    %c0_i32_0 = arith.constant 0 : i32
    %c0_i32_1 = arith.constant 0 : i32
    return %c0_i32, %c0_i32_0 : i32, i32
  }
  func.func @transform_5(%arg0: i32, %arg1: i32) -> (i32, i32) {
    %c0_i32 = arith.constant 0 : i32
    %c0_i32_0 = arith.constant 0 : i32
    %c0_i32_1 = arith.constant 0 : i32
    return %c0_i32, %c0_i32_0 : i32, i32
  }
  func.func @transform_6(%arg0: i32, %arg1: i32) -> (i32, i32) {
    %c0_i32 = arith.constant 0 : i32
    %c0_i32_0 = arith.constant 0 : i32
    %c0_i32_1 = arith.constant 0 : i32
    return %c0_i32, %c0_i32_0 : i32, i32
  }
  func.func @transform_7(%arg0: i32, %arg1: i32) -> (i32, i32) {
    %c0_i32 = arith.constant 0 : i32
    %c0_i32_0 = arith.constant 0 : i32
    %c0_i32_1 = arith.constant 0 : i32
    return %c0_i32, %c0_i32_0 : i32, i32
  }
  func.func @transform_8(%arg0: i32, %arg1: i32) -> (i32, i32) {
    %c0_i32 = arith.constant 0 : i32
    %c0_i32_0 = arith.constant 0 : i32
    %c0_i32_1 = arith.constant 0 : i32
    return %c0_i32, %c0_i32_0 : i32, i32
  }
  func.func @transform_9(%arg0: i32, %arg1: i32) -> (i32, i32) {
    %c0_i32 = arith.constant 0 : i32
    %c0_i32_0 = arith.constant 0 : i32
    %c0_i32_1 = arith.constant 0 : i32
    return %c0_i32, %c0_i32_0 : i32, i32
  }
  func.func @transform_10(%arg0: i32, %arg1: i32) -> (i32, i32) {
    %c0_i32 = arith.constant 0 : i32
    %c0_i32_0 = arith.constant 0 : i32
    %c0_i32_1 = arith.constant 0 : i32
    return %c0_i32, %c0_i32_0 : i32, i32
  }
  func.func @transform_11(%arg0: i32, %arg1: i32) -> (i32, i32) {
    %c0_i32 = arith.constant 0 : i32
    %c0_i32_0 = arith.constant 0 : i32
    %c0_i32_1 = arith.constant 0 : i32
    return %c0_i32, %c0_i32_0 : i32, i32
  }
  func.func @transform_12(%arg0: i32, %arg1: i32) -> (i32, i32) {
    %c0_i32 = arith.constant 0 : i32
    %c0_i32_0 = arith.constant 0 : i32
    return %arg0, %c0_i32 : i32, i32
  }
}

</mosaic_0001>

<llo_original>
// kernel: tile.9
$region0: #{tile.9}
  %s0 = inlined_call_operand.vmem [shape: f32[4,16,4], index: 0, kind: input, shape index: {}]
  %s1 = inlined_call_operand.vmem [shape: f32[4,64], index: 1, kind: output, shape index: {}]
  $region1: #{tile.9} parent=0
    #allocation0 [shape = 'u8[4096]{0}', space=vmem, size = 0x1000, scoped, tag = 'scoped mem for output reshape']
    %s2 = smov 3
    %v3 = vld [vmem:[%s0] ss:$16 sm:%s2]
    %s4 = smov 12
    %v5 = vld [vmem:[%s0] ss:$16 sm:%s4]
    %vm6 = vcmask 1043458
    %v7 = vsel %vm6, %v5, %v3
    %vm8 = vcmask 31744
    %9 = vst.msk [vmem:[#allocation0] sm:$0xf] %vm8, %v7
    %s10 = scalar_lea.vmem %s0, 15
    %s11 = smov 3
    %v12 = vld [vmem:[%s10] ss:$16 sm:%s11]
    %s13 = scalar_lea.vmem %s0, 15
    %s14 = smov 12
    %v15 = vld [vmem:[%s13] ss:$16 sm:%s14]
    %vm16 = vcmask 1043458
    %v17 = vsel %vm16, %v15, %v12
    %18 = vrot.lane.b32.xlu0 %v17, 60
    %v19 = vpop.permute.xlu0 %18
    %vm20 = vcmask 523744
    %21 = vst.msk [vmem:[#allocation0] sm:$0xf] %vm20, %v19
    %s22 = scalar_lea.vmem %s0, 14
    %s23 = smov 3
    %v24 = vld [vmem:[%s22] ss:$16 sm:%s23]
    %s25 = scalar_lea.vmem %s0, 14
    %s26 = smov 12
    %v27 = vld [vmem:[%s25] ss:$16 sm:%s26]
    %vm28 = vcmask 1043458
    %v29 = vsel %vm28, %v27, %v24
    %30 = vrot.lane.b32.xlu0 %v29, 56
    %v31 = vpop.permute.xlu0 %30
    %vm32 = vcmask 490944
    %33 = vst.msk [vmem:[#allocation0] sm:$0xf] %vm32, %v31
    %s34 = scalar_lea.vmem %s0, 13
    %s35 = smov 3
    %v36 = vld [vmem:[%s34] ss:$16 sm:%s35]
    %s37 = scalar_lea.vmem %s0, 13
    %s38 = smov 12
    %v39 = vld [vmem:[%s37] ss:$16 sm:%s38]
    %vm40 = vcmask 1043458
    %v41 = vsel %vm40, %v39, %v36
    %42 = vrot.lane.b32.xlu0 %v41, 52
    %v43 = vpop.permute.xlu0 %42
    %vm44 = vcmask 458144
    %45 = vst.msk [vmem:[#allocation0] sm:$0xf] %vm44, %v43
    %s46 = scalar_lea.vmem %s0, 12
    %s47 = smov 3
    %v48 = vld [vmem:[%s46] ss:$16 sm:%s47]
    %s49 = scalar_lea.vmem %s0, 12
    %s50 = smov 12
    %v51 = vld [vmem:[%s49] ss:$16 sm:%s50]
    %vm52 = vcmask 1043458
    %v53 = vsel %vm52, %v51, %v48
    %54 = vrot.lane.b32.xlu0 %v53, 48
    %v55 = vpop.permute.xlu0 %54
    %vm56 = vcmask 425344
    %57 = vst.msk [vmem:[#allocation0] sm:$0xf] %vm56, %v55
    %s58 = scalar_lea.vmem %s0, 11
    %s59 = smov 3
    %v60 = vld [vmem:[%s58] ss:$16 sm:%s59]
    %s61 = scalar_lea.vmem %s0, 11
    %s62 = smov 12
    %v63 = vld [vmem:[%s61] ss:$16 sm:%s62]
    %vm64 = vcmask 1043458
    %v65 = vsel %vm64, %v63, %v60
    %66 = vrot.lane.b32.xlu0 %v65, 44
    %v67 = vpop.permute.xlu0 %66
    %vm68 = vcmask 392544
    %69 = vst.msk [vmem:[#allocation0] sm:$0xf] %vm68, %v67
    %s70 = scalar_lea.vmem %s0, 10
    %s71 = smov 3
    %v72 = vld [vmem:[%s70] ss:$16 sm:%s71]
    %s73 = scalar_lea.vmem %s0, 10
    %s74 = smov 12
    %v75 = vld [vmem:[%s73] ss:$16 sm:%s74]
    %vm76 = vcmask 1043458
    %v77 = vsel %vm76, %v75, %v72
    %78 = vrot.lane.b32.xlu0 %v77, 40
    %v79 = vpop.permute.xlu0 %78
    %vm80 = vcmask 359744
    %81 = vst.msk [vmem:[#allocation0] sm:$0xf] %vm80, %v79
    %s82 = scalar_lea.vmem %s0, 9
    %s83 = smov 3
    %v84 = vld [vmem:[%s82] ss:$16 sm:%s83]
    %s85 = scalar_lea.vmem %s0, 9
    %s86 = smov 12
    %v87 = vld [vmem:[%s85] ss:$16 sm:%s86]
    %vm88 = vcmask 1043458
    %v89 = vsel %vm88, %v87, %v84
    %90 = vrot.lane.b32.xlu0 %v89, 36
    %v91 = vpop.permute.xlu0 %90
    %vm92 = vcmask 326944
    %93 = vst.msk [vmem:[#allocation0] sm:$0xf] %vm92, %v91
    %s94 = scalar_lea.vmem %s0, 8
    %s95 = smov 3
    %v96 = vld [vmem:[%s94] ss:$16 sm:%s95]
    %s97 = scalar_lea.vmem %s0, 8
    %s98 = smov 12
    %v99 = vld [vmem:[%s97] ss:$16 sm:%s98]
    %vm100 = vcmask 1043458
    %v101 = vsel %vm100, %v99, %v96
    %102 = vrot.lane.b32.xlu0 %v101, 32
    %v103 = vpop.permute.xlu0 %102
    %vm104 = vcmask 294144
    %105 = vst.msk [vmem:[#allocation0] sm:$0xf] %vm104, %v103
    %s106 = scalar_lea.vmem %s0, 7
    %s107 = smov 3
    %v108 = vld [vmem:[%s106] ss:$16 sm:%s107]
    %s109 = scalar_lea.vmem %s0, 7
    %s110 = smov 12
    %v111 = vld [vmem:[%s109] ss:$16 sm:%s110]
    %vm112 = vcmask 1043458
    %v113 = vsel %vm112, %v111, %v108
    %114 = vrot.lane.b32.xlu0 %v113, 28
    %v115 = vpop.permute.xlu0 %114
    %vm116 = vcmask 261344
    %117 = vst.msk [vmem:[#allocation0] sm:$0xf] %vm116, %v115
    %s118 = scalar_lea.vmem %s0, 6
    %s119 = smov 3
    %v120 = vld [vmem:[%s118] ss:$16 sm:%s119]
    %s121 = scalar_lea.vmem %s0, 6
    %s122 = smov 12
    %v123 = vld [vmem:[%s121] ss:$16 sm:%s122]
    %vm124 = vcmask 1043458
    %v125 = vsel %vm124, %v123, %v120
    %126 = vrot.lane.b32.xlu0 %v125, 24
    %v127 = vpop.permute.xlu0 %126
    %vm128 = vcmask 228544
    %129 = vst.msk [vmem:[#allocation0] sm:$0xf] %vm128, %v127
    %s130 = scalar_lea.vmem %s0, 5
    %s131 = smov 3
    %v132 = vld [vmem:[%s130] ss:$16 sm:%s131]
    %s133 = scalar_lea.vmem %s0, 5
    %s134 = smov 12
    %v135 = vld [vmem:[%s133] ss:$16 sm:%s134]
    %vm136 = vcmask 1043458
    %v137 = vsel %vm136, %v135, %v132
    %138 = vrot.lane.b32.xlu0 %v137, 20
    %v139 = vpop.permute.xlu0 %138
    %vm140 = vcmask 195744
    %141 = vst.msk [vmem:[#allocation0] sm:$0xf] %vm140, %v139
    %s142 = scalar_lea.vmem %s0, 4
    %s143 = smov 3
    %v144 = vld [vmem:[%s142] ss:$16 sm:%s143]
    %s145 = scalar_lea.vmem %s0, 4
    %s146 = smov 12
    %v147 = vld [vmem:[%s145] ss:$16 sm:%s146]
    %vm148 = vcmask 1043458
    %v149 = vsel %vm148, %v147, %v144
    %150 = vrot.lane.b32.xlu0 %v149, 16
    %v151 = vpop.permute.xlu0 %150
    %vm152 = vcmask 162944
    %153 = vst.msk [vmem:[#allocation0] sm:$0xf] %vm152, %v151
    %s154 = scalar_lea.vmem %s0, 3
    %s155 = smov 3
    %v156 = vld [vmem:[%s154] ss:$16 sm:%s155]
    %s157 = scalar_lea.vmem %s0, 3
    %s158 = smov 12
    %v159 = vld [vmem:[%s157] ss:$16 sm:%s158]
    %vm160 = vcmask 1043458
    %v161 = vsel %vm160, %v159, %v156
    %162 = vrot.lane.b32.xlu0 %v161, 12
    %v163 = vpop.permute.xlu0 %162
    %vm164 = vcmask 130144
    %165 = vst.msk [vmem:[#allocation0] sm:$0xf] %vm164, %v163
    %s166 = scalar_lea.vmem %s0, 2
    %s167 = smov 3
    %v168 = vld [vmem:[%s166] ss:$16 sm:%s167]
    %s169 = scalar_lea.vmem %s0, 2
    %s170 = smov 12
    %v171 = vld [vmem:[%s169] ss:$16 sm:%s170]
    %vm172 = vcmask 1043458
    %v173 = vsel %vm172, %v171, %v168
    %174 = vrot.lane.b32.xlu0 %v173, 8
    %v175 = vpop.permute.xlu0 %174
    %vm176 = vcmask 97344
    %177 = vst.msk [vmem:[#allocation0] sm:$0xf] %vm176, %v175
    %s178 = scalar_lea.vmem %s0, 1
    %s179 = smov 3
    %v180 = vld [vmem:[%s178] ss:$16 sm:%s179]
    %s181 = scalar_lea.vmem %s0, 1
    %s182 = smov 12
    %v183 = vld [vmem:[%s181] ss:$16 sm:%s182]
    %vm184 = vcmask 1043458
    %v185 = vsel %vm184, %v183, %v180
    %186 = vrot.lane.b32.xlu0 %v185, 4
    %v187 = vpop.permute.xlu0 %186
    %vm188 = vcmask 64544
    %189 = vst.msk [vmem:[#allocation0] sm:$0xf] %vm188, %v187
    %s191 = sshll.u32 1, 4
    %s192 = ssub.s32 %s191, 1
    %v194 = vld [vmem:[#allocation0] sm:%s192]
    %s195 = sshll.u32 1, 4
    %s196 = ssub.s32 %s195, 1
    %197 = vst [vmem:[%s1] sm:%s196] %v194

// kernel: cde_forward_pallas.1
$region0: #{cde_forward_pallas.1}
  #allocation0 [shape = 'u32[]', space=smem, size = 0x4, offset = 0x4, fixed_abs, tag = 'smem constant byte address 0x4 - core index']
  #allocation1 [shape = 'u32[144,128]{1,0:T(1,128)}', space=vmem, size = 0x12000, scoped, tag = 'internal scratch']
  #allocation2 [shape = 'f32[4,16]{1,0:T(4,128)}', space=vmem, size = 0x800, scoped, tag = 'scratch operand']
  #allocation3 [shape = 'f32[4,16]{1,0:T(4,128)}', space=vmem, size = 0x800, scoped, tag = 'scratch operand']
  #allocation4 [shape = 'f32[4,16]{1,0:T(4,128)}', space=vmem, size = 0x800, scoped, tag = 'scratch operand']
  %s0 = inlined_call_operand.vmem [shape: f32[4,16], index: 0, kind: input, shape index: {}]
  %s1 = inlined_call_operand.vmem [shape: f32[4,16], index: 1, kind: input, shape index: {}]
  %s2 = inlined_call_operand.vmem [shape: f32[7,4,4], index: 2, kind: input, shape index: {}]
  %s3 = inlined_call_operand.vmem [shape: f32[1,32], index: 3, kind: input, shape index: {}]
  %s4 = inlined_call_operand.vmem [shape: f32[16,32], index: 4, kind: input, shape index: {}]
  %s5 = inlined_call_operand.vmem [shape: f32[1,32], index: 5, kind: input, shape index: {}]
  %s6 = inlined_call_operand.vmem [shape: f32[32,32], index: 6, kind: input, shape index: {}]
  %s7 = inlined_call_operand.vmem [shape: f32[1,32], index: 7, kind: input, shape index: {}]
  %s8 = inlined_call_operand.vmem [shape: f32[32,64], index: 8, kind: input, shape index: {}]
  %s9 = inlined_call_operand.vmem [shape: f32[1,64], index: 9, kind: input, shape index: {}]
  %s10 = inlined_call_operand.vmem [shape: f32[4,64], index: 10, kind: input, shape index: {}]
  %s11 = inlined_call_operand.vmem [shape: f32[64,16], index: 11, kind: input, shape index: {}]
  %s12 = inlined_call_operand.vmem [shape: f32[4,16], index: 12, kind: output, shape index: {}]
  %s13 = sld [smem:[#allocation0]]
  $region73: #{cde_forward_pallas.1} parent=0
    _
  %s15 = ssub.s32 1, %s13
  %s16 = scalar_select 0, %s15, %s13
  // Predicated region
  $region2: #{cde_forward_pallas.1} parent=0 // pred_check
    _
  $region3: #{cde_forward_pallas.1} parent=0 // pred_check_branch
    %18 = sbr.rel (0) target = $region5
  $region4: #{cde_forward_pallas.1} parent=0 // pred_region
    _
  $region5: #{cde_forward_pallas.1} parent=0 // pred_fallthru
    _
  // Predicated region
  $region6: #{cde_forward_pallas.1} parent=0 // pred_check
    _
  $region7: #{cde_forward_pallas.1} parent=0 // pred_check_branch
    %20 = sbr.rel (0) target = $region9
  $region8: #{cde_forward_pallas.1} parent=0 // pred_region
    _
  $region9: #{cde_forward_pallas.1} parent=0 // pred_fallthru
    _
  // Predicated region
  $region10: #{cde_forward_pallas.1} parent=0 // pred_check
    _
  $region11: #{cde_forward_pallas.1} parent=0 // pred_check_branch
    %22 = sbr.rel (0) target = $region13
  $region12: #{cde_forward_pallas.1} parent=0 // pred_region
    _
  $region13: #{cde_forward_pallas.1} parent=0 // pred_fallthru
    _
  // Predicated region
  $region14: #{cde_forward_pallas.1} parent=0 // pred_check
    _
  $region15: #{cde_forward_pallas.1} parent=0 // pred_check_branch
    %24 = sbr.rel (0) target = $region17
  $region16: #{cde_forward_pallas.1} parent=0 // pred_region
    _
  $region17: #{cde_forward_pallas.1} parent=0 // pred_fallthru
    _
  // Predicated region
  $region18: #{cde_forward_pallas.1} parent=0 // pred_check
    _
  $region19: #{cde_forward_pallas.1} parent=0 // pred_check_branch
    %26 = sbr.rel (0) target = $region21
  $region20: #{cde_forward_pallas.1} parent=0 // pred_region
    _
  $region21: #{cde_forward_pallas.1} parent=0 // pred_fallthru
    _
  // Predicated region
  $region22: #{cde_forward_pallas.1} parent=0 // pred_check
    _
  $region23: #{cde_forward_pallas.1} parent=0 // pred_check_branch
    %28 = sbr.rel (0) target = $region25
  $region24: #{cde_forward_pallas.1} parent=0 // pred_region
    _
  $region25: #{cde_forward_pallas.1} parent=0 // pred_fallthru
    _
  // Predicated region
  $region26: #{cde_forward_pallas.1} parent=0 // pred_check
    _
  $region27: #{cde_forward_pallas.1} parent=0 // pred_check_branch
    %30 = sbr.rel (0) target = $region29
  $region28: #{cde_forward_pallas.1} parent=0 // pred_region
    _
  $region29: #{cde_forward_pallas.1} parent=0 // pred_fallthru
    _
  // Predicated region
  $region30: #{cde_forward_pallas.1} parent=0 // pred_check
    _
  $region31: #{cde_forward_pallas.1} parent=0 // pred_check_branch
    %32 = sbr.rel (0) target = $region33
  $region32: #{cde_forward_pallas.1} parent=0 // pred_region
    _
  $region33: #{cde_forward_pallas.1} parent=0 // pred_fallthru
    _
  // Predicated region
  $region34: #{cde_forward_pallas.1} parent=0 // pred_check
    _
  $region35: #{cde_forward_pallas.1} parent=0 // pred_check_branch
    %34 = sbr.rel (0) target = $region37
  $region36: #{cde_forward_pallas.1} parent=0 // pred_region
    _
  $region37: #{cde_forward_pallas.1} parent=0 // pred_fallthru
    _
  // Predicated region
  $region38: #{cde_forward_pallas.1} parent=0 // pred_check
    _
  $region39: #{cde_forward_pallas.1} parent=0 // pred_check_branch
    %36 = sbr.rel (0) target = $region41
  $region40: #{cde_forward_pallas.1} parent=0 // pred_region
    _
  $region41: #{cde_forward_pallas.1} parent=0 // pred_fallthru
    _
  // Predicated region
  $region42: #{cde_forward_pallas.1} parent=0 // pred_check
    _
  $region43: #{cde_forward_pallas.1} parent=0 // pred_check_branch
    %38 = sbr.rel (0) target = $region45
  $region44: #{cde_forward_pallas.1} parent=0 // pred_region
    _
  $region45: #{cde_forward_pallas.1} parent=0 // pred_fallthru
    _
  // Predicated region
  $region46: #{cde_forward_pallas.1} parent=0 // pred_check
    _
  $region47: #{cde_forward_pallas.1} parent=0 // pred_check_branch
    %40 = sbr.rel (0) target = $region49
  $region48: #{cde_forward_pallas.1} parent=0 // pred_region
    _
  $region49: #{cde_forward_pallas.1} parent=0 // pred_fallthru
    _
  %v41 = vld [vmem:[%s3] sm:$0x1]
  %v43 = vlaneseq
  %v44 = vshrl.u32 %v43, 7
  %v45 = vsub.s32 0, %v44
  %v46 = vrot.slane %v41, %v45
  %v48 = vld [vmem:[%s4] sm:$0xff]
  %v49 = vld [vmem:[%s4 + $0x8] sm:$0xff]
  %v50 = vld [vmem:[%s5] sm:$0x1]
  %v52 = vlaneseq
  %v53 = vshrl.u32 %v52, 7
  %v54 = vsub.s32 0, %v53
  %v55 = vrot.slane %v50, %v54
  %v57 = vld [vmem:[%s6] sm:$0xff]
  %v58 = vld [vmem:[%s6 + $0x8] sm:$0xff]
  %v59 = vld [vmem:[%s6 + $0x10] sm:$0xff]
  %v60 = vld [vmem:[%s6 + $0x18] sm:$0xff]
  %v61 = vld [vmem:[%s7] sm:$0x1]
  %v63 = vlaneseq
  %v64 = vshrl.u32 %v63, 7
  %v65 = vsub.s32 0, %v64
  %v66 = vrot.slane %v61, %v65
  %v68 = vld [vmem:[%s8] sm:$0xff]
  %v69 = vld [vmem:[%s8 + $0x8] sm:$0xff]
  %v70 = vld [vmem:[%s8 + $0x10] sm:$0xff]
  %v71 = vld [vmem:[%s8 + $0x18] sm:$0xff]
  %v72 = vld [vmem:[%s9] sm:$0x1]
  %v74 = vlaneseq
  %v75 = vshrl.u32 %v74, 7
  %v76 = vsub.s32 0, %v75
  %v77 = vrot.slane %v72, %v76
  %v79 = vld [vmem:[%s10] sm:$0xf]
  %v80 = vld [vmem:[%s11] sm:$0xff]
  %v81 = vld [vmem:[%s11 + $0x8] sm:$0xff]
  %v82 = vld [vmem:[%s11 + $0x10] sm:$0xff]
  %v83 = vld [vmem:[%s11 + $0x18] sm:$0xff]
  %v84 = vld [vmem:[%s11 + $0x20] sm:$0xff]
  %v85 = vld [vmem:[%s11 + $0x28] sm:$0xff]
  %v86 = vld [vmem:[%s11 + $0x30] sm:$0xff]
  %v87 = vld [vmem:[%s11 + $0x38] sm:$0xff]
  %p88 = scmp.eq.s32.totalorder 0, 0
  // Predicated region
  $region50: #{cde_forward_pallas.1} parent=0 // pred_check
    %p89 = pneg %p88
  $region51: #{cde_forward_pallas.1} parent=0 // pred_check_branch
    %91 = sbr.rel (%p89) target = $region53
  $region52: #{cde_forward_pallas.1} parent=0 // pred_region
    %v92 = vld [vmem:[%s0] sm:$0xf]
    %vm93 = vcmask 125952
    %94 = vst.msk [vmem:[#allocation2] sm:$0xf] %vm93, %v92
    %v95 = vld [vmem:[%s0] sm:$0xf]
    %96 = vst.msk [vmem:[#allocation3] sm:$0xf] %vm93, %v95
    %v97 = vld [vmem:[%s1] sm:$0xf]
    %98 = vst.msk [vmem:[#allocation4] sm:$0xf] %vm93, %v97
  $region53: #{cde_forward_pallas.1} parent=0 // pred_fallthru
    _
  %s99 = smul.u32 0, 7
  %v100 = vld [vmem:[#allocation2] sm:$0xf]
  %v101 = vld [vmem:[#allocation3] sm:$0xf]
  %v102 = vld [vmem:[#allocation4] sm:$0xf]
  loop: start=0, step=1, limit=7
  $region54: #{cde_forward_pallas.1} parent=0 // loop_pre_header
    _
  $region55: #{cde_forward_pallas.1} parent=0 // loop_header
    %s104 = sphi 0, %s108
    %p105 = scmp.ge.s32.totalorder %s104, 7
    %v109 = vphi %v100, %v518
    %v110 = vphi %v101, %v117
    %v111 = vphi %v102, %v513
  $region56: #{cde_forward_pallas.1} parent=0 // loop_header_branch
    %107 = sbr.rel (%p105) target = $region60
  $region57: #{cde_forward_pallas.1} parent=0 // loop_body
    %s112 = smul.u32 %s104, 4
    %s113 = scalar_lea.vmem %s2, %s112
    %v114 = vld [vmem:[%s113] sm:$0xf]
    %v115 = vmul.f32 %v109, 2.0
    %v116 = vsub.f32 %v115, %v110
    %v117 = vadd.f32 %v116, %v111
    %s118 = sadd.s32 %s99, %s104
    %s119 = sadd.s32 %s118, 1
    %s120 = scvt.s32.f32 %s119
    %v121 = vstv %s120
    %v122 = vmul.f32 %v121, %v46
    %vm123 = vcmask 130048
    %v125 = vsel %vm123, %v117, 0
    %127 = vmatprep.subr.mxu0 0.0
    %128 = vmatpush1.msra.mxu0 0.0
    %129 = vmatprep.subr.mxu0 0.0
    %130 = vmatpush1.msra.mxu0 0.0
    %131 = vmatprep.subr.mxu0 0.0
    %132 = vmatpush1.msra.mxu0 0.0
    %133 = vmatprep.subr.mxu0 0.0
    %134 = vmatpush1.msra.mxu0 0.0
    %135 = vmatprep.subr.mxu0 0.0
    %136 = vmatpush1.msra.mxu0 0.0
    %137 = vmatprep.subr.mxu0 0.0
    %138 = vmatpush1.msra.mxu0 0.0
    %139 = vmatprep.subr.mxu0 0.0
    %140 = vmatpush1.msra.mxu0 0.0
    %141 = vmatprep.subr.mxu0 0.0
    %142 = vmatpush1.msra.mxu0 0.0
    %143 = vmatprep.subr.mxu0 0.0
    %144 = vmatpush1.msra.mxu0 0.0
    %145 = vmatprep.subr.mxu0 0.0
    %146 = vmatpush1.msra.mxu0 0.0
    %147 = vmatprep.subr.mxu0 0.0
    %148 = vmatpush1.msra.mxu0 0.0
    %149 = vmatprep.subr.mxu0 0.0
    %150 = vmatpush1.msra.mxu0 0.0
    %151 = vmatprep.subr.mxu0 0.0
    %152 = vmatpush1.msra.mxu0 0.0
    %153 = vmatprep.subr.mxu0 0.0
    %154 = vmatpush1.msra.mxu0 0.0
    %155 = vmatprep.subr.mxu0 0.0
    %156 = vmatpush1.msra.mxu0 %v49
    %157 = vmatprep.subr.mxu0 0.0
    %158 = vmatpush1.msra.mxu0 %v48
    %159 = vmatprep.subr.mxu0 0.0
    %160 = vmatpush2.msra.mxu0 0.0
    %161 = vmatprep.subr.mxu0 0.0
    %162 = vmatpush2.msra.mxu0 0.0
    %163 = vmatprep.subr.mxu0 0.0
    %164 = vmatpush2.msra.mxu0 0.0
    %165 = vmatprep.subr.mxu0 0.0
    %166 = vmatpush2.msra.mxu0 0.0
    %167 = vmatprep.subr.mxu0 0.0
    %168 = vmatpush2.msra.mxu0 0.0
    %169 = vmatprep.subr.mxu0 0.0
    %170 = vmatpush2.msra.mxu0 0.0
    %171 = vmatprep.subr.mxu0 0.0
    %172 = vmatpush2.msra.mxu0 0.0
    %173 = vmatprep.subr.mxu0 0.0
    %174 = vmatpush2.msra.mxu0 0.0
    %175 = vmatprep.subr.mxu0 0.0
    %176 = vmatpush2.msra.mxu0 0.0
    %177 = vmatprep.subr.mxu0 0.0
    %178 = vmatpush2.msra.mxu0 0.0
    %179 = vmatprep.subr.mxu0 0.0
    %180 = vmatpush2.msra.mxu0 0.0
    %181 = vmatprep.subr.mxu0 0.0
    %182 = vmatpush2.msra.mxu0 0.0
    %183 = vmatprep.subr.mxu0 0.0
    %184 = vmatpush2.msra.mxu0 0.0
    %185 = vmatprep.subr.mxu0 0.0
    %186 = vmatpush2.msra.mxu0 0.0
    %187 = vmatprep.subr.mxu0 0.0
    %188 = vmatpush2.msra.mxu0 0.0
    %189 = vmatprep.subr.mxu0 0.0
    %190 = vmatpush2.msra.mxu0 0.0
    %191 = vmatprep.mubr.f32.mxu0 0.0
    %192 = vmatmul.mubr.f32.gmra.mxu0 %v125
    %v193 = vpop.f32.mrf.mxu0
    %v194 = vadd.f32 0.0, %v193
    %v195 = vpop.f32.mrf.mxu0
    %196 = vdwg.mxu0
    %v197 = vadd.f32 %v122, %v194
    %v198 = vadd.f32 %v197, %v55
    %vm199 = vcmp.gt.f32.partialorder %v198, 20.0
    %v200 = vmin.f32 %v198, 20.0
    %v201 = vmul.f32 %v200, 1.442695
    %v202 = vpow.pop %v201
    %v203 = vadd.f32 %v202, 1.0
    %v204 = vlog2.pop %v203
    %v205 = vmul.f32 %v204, 0.6931472
    %v206 = vsel %vm199, %v198, %v205
    %vm207 = vcmask 261120
    %v209 = vsel %vm207, %v206, 0
    %211 = vmatprep.subr.mxu0 0.0
    %212 = vmatpush1.msra.mxu0 0.0
    %213 = vmatprep.subr.mxu0 0.0
    %214 = vmatpush1.msra.mxu0 0.0
    %215 = vmatprep.subr.mxu0 0.0
    %216 = vmatpush1.msra.mxu0 0.0
    %217 = vmatprep.subr.mxu0 0.0
    %218 = vmatpush1.msra.mxu0 0.0
    %219 = vmatprep.subr.mxu0 0.0
    %220 = vmatpush1.msra.mxu0 0.0
    %221 = vmatprep.subr.mxu0 0.0
    %222 = vmatpush1.msra.mxu0 0.0
    %223 = vmatprep.subr.mxu0 0.0
    %224 = vmatpush1.msra.mxu0 0.0
    %225 = vmatprep.subr.mxu0 0.0
    %226 = vmatpush1.msra.mxu0 0.0
    %227 = vmatprep.subr.mxu0 0.0
    %228 = vmatpush1.msra.mxu0 0.0
    %229 = vmatprep.subr.mxu0 0.0
    %230 = vmatpush1.msra.mxu0 0.0
    %231 = vmatprep.subr.mxu0 0.0
    %232 = vmatpush1.msra.mxu0 0.0
    %233 = vmatprep.subr.mxu0 0.0
    %234 = vmatpush1.msra.mxu0 0.0
    %235 = vmatprep.subr.mxu0 0.0
    %236 = vmatpush1.msra.mxu0 %v60
    %237 = vmatprep.subr.mxu0 0.0
    %238 = vmatpush1.msra.mxu0 %v59
    %239 = vmatprep.subr.mxu0 0.0
    %240 = vmatpush1.msra.mxu0 %v58
    %241 = vmatprep.subr.mxu0 0.0
    %242 = vmatpush1.msra.mxu0 %v57
    %243 = vmatprep.subr.mxu0 0.0
    %244 = vmatpush2.msra.mxu0 0.0
    %245 = vmatprep.subr.mxu0 0.0
    %246 = vmatpush2.msra.mxu0 0.0
    %247 = vmatprep.subr.mxu0 0.0
    %248 = vmatpush2.msra.mxu0 0.0
    %249 = vmatprep.subr.mxu0 0.0
    %250 = vmatpush2.msra.mxu0 0.0
    %251 = vmatprep.subr.mxu0 0.0
    %252 = vmatpush2.msra.mxu0 0.0
    %253 = vmatprep.subr.mxu0 0.0
    %254 = vmatpush2.msra.mxu0 0.0
    %255 = vmatprep.subr.mxu0 0.0
    %256 = vmatpush2.msra.mxu0 0.0
    %257 = vmatprep.subr.mxu0 0.0
    %258 = vmatpush2.msra.mxu0 0.0
    %259 = vmatprep.subr.mxu0 0.0
    %260 = vmatpush2.msra.mxu0 0.0
    %261 = vmatprep.subr.mxu0 0.0
    %262 = vmatpush2.msra.mxu0 0.0
    %263 = vmatprep.subr.mxu0 0.0
    %264 = vmatpush2.msra.mxu0 0.0
    %265 = vmatprep.subr.mxu0 0.0
    %266 = vmatpush2.msra.mxu0 0.0
    %267 = vmatprep.subr.mxu0 0.0
    %268 = vmatpush2.msra.mxu0 0.0
    %269 = vmatprep.subr.mxu0 0.0
    %270 = vmatpush2.msra.mxu0 0.0
    %271 = vmatprep.subr.mxu0 0.0
    %272 = vmatpush2.msra.mxu0 0.0
    %273 = vmatprep.subr.mxu0 0.0
    %274 = vmatpush2.msra.mxu0 0.0
    %275 = vmatprep.mubr.f32.mxu0 0.0
    %276 = vmatmul.mubr.f32.gmra.mxu0 %v209
    %v277 = vpop.f32.mrf.mxu0
    %v278 = vadd.f32 %v66, %v277
    %v279 = vpop.f32.mrf.mxu0
    %280 = vdwg.mxu0
    %vm281 = vcmp.gt.f32.partialorder %v278, 20.0
    %v282 = vmin.f32 %v278, 20.0
    %v283 = vmul.f32 %v282, 1.442695
    %v284 = vpow.pop %v283
    %v285 = vadd.f32 %v284, 1.0
    %v286 = vlog2.pop %v285
    %v287 = vmul.f32 %v286, 0.6931472
    %v288 = vsel %vm281, %v278, %v287
    %v290 = vsel %vm207, %v288, 0
    %292 = vmatprep.subr.mxu0 0.0
    %293 = vmatpush1.msra.mxu0 0.0
    %294 = vmatprep.subr.mxu0 0.0
    %295 = vmatpush1.msra.mxu0 0.0
    %296 = vmatprep.subr.mxu0 0.0
    %297 = vmatpush1.msra.mxu0 0.0
    %298 = vmatprep.subr.mxu0 0.0
    %299 = vmatpush1.msra.mxu0 0.0
    %300 = vmatprep.subr.mxu0 0.0
    %301 = vmatpush1.msra.mxu0 0.0
    %302 = vmatprep.subr.mxu0 0.0
    %303 = vmatpush1.msra.mxu0 0.0
    %304 = vmatprep.subr.mxu0 0.0
    %305 = vmatpush1.msra.mxu0 0.0
    %306 = vmatprep.subr.mxu0 0.0
    %307 = vmatpush1.msra.mxu0 0.0
    %308 = vmatprep.subr.mxu0 0.0
    %309 = vmatpush1.msra.mxu0 0.0
    %310 = vmatprep.subr.mxu0 0.0
    %311 = vmatpush1.msra.mxu0 0.0
    %312 = vmatprep.subr.mxu0 0.0
    %313 = vmatpush1.msra.mxu0 0.0
    %314 = vmatprep.subr.mxu0 0.0
    %315 = vmatpush1.msra.mxu0 0.0
    %316 = vmatprep.subr.mxu0 0.0
    %317 = vmatpush1.msra.mxu0 %v71
    %318 = vmatprep.subr.mxu0 0.0
    %319 = vmatpush1.msra.mxu0 %v70
    %320 = vmatprep.subr.mxu0 0.0
    %321 = vmatpush1.msra.mxu0 %v69
    %322 = vmatprep.subr.mxu0 0.0
    %323 = vmatpush1.msra.mxu0 %v68
    %324 = vmatprep.subr.mxu0 0.0
    %325 = vmatpush2.msra.mxu0 0.0
    %326 = vmatprep.subr.mxu0 0.0
    %327 = vmatpush2.msra.mxu0 0.0
    %328 = vmatprep.subr.mxu0 0.0
    %329 = vmatpush2.msra.mxu0 0.0
    %330 = vmatprep.subr.mxu0 0.0
    %331 = vmatpush2.msra.mxu0 0.0
    %332 = vmatprep.subr.mxu0 0.0
    %333 = vmatpush2.msra.mxu0 0.0
    %334 = vmatprep.subr.mxu0 0.0
    %335 = vmatpush2.msra.mxu0 0.0
    %336 = vmatprep.subr.mxu0 0.0
    %337 = vmatpush2.msra.mxu0 0.0
    %338 = vmatprep.subr.mxu0 0.0
    %339 = vmatpush2.msra.mxu0 0.0
    %340 = vmatprep.subr.mxu0 0.0
    %341 = vmatpush2.msra.mxu0 0.0
    %342 = vmatprep.subr.mxu0 0.0
    %343 = vmatpush2.msra.mxu0 0.0
    %344 = vmatprep.subr.mxu0 0.0
    %345 = vmatpush2.msra.mxu0 0.0
    %346 = vmatprep.subr.mxu0 0.0
    %347 = vmatpush2.msra.mxu0 0.0
    %348 = vmatprep.subr.mxu0 0.0
    %349 = vmatpush2.msra.mxu0 0.0
    %350 = vmatprep.subr.mxu0 0.0
    %351 = vmatpush2.msra.mxu0 0.0
    %352 = vmatprep.subr.mxu0 0.0
    %353 = vmatpush2.msra.mxu0 0.0
    %354 = vmatprep.subr.mxu0 0.0
    %355 = vmatpush2.msra.mxu0 0.0
    %356 = vmatprep.mubr.f32.mxu0 0.0
    %357 = vmatmul.mubr.f32.gmra.mxu0 %v290
    %v358 = vpop.f32.mrf.mxu0
    %v359 = vadd.f32 %v77, %v358
    %v360 = vpop.f32.mrf.mxu0
    %361 = vdwg.mxu0
    %v362 = vtanh.pop %v359
    %vm363 = vcmask 31744
    %v365 = vsel %vm363, %v114, 0
    %vm367 = vcmask 1043456
    %v369 = vsel %vm367, %v79, 0
    %371 = vmatprep.subr.mxu0 0.0
    %372 = vmatpush1.msra.mxu0 0.0
    %373 = vmatprep.subr.mxu0 0.0
    %374 = vmatpush1.msra.mxu0 0.0
    %375 = vmatprep.subr.mxu0 0.0
    %376 = vmatpush1.msra.mxu0 0.0
    %377 = vmatprep.subr.mxu0 0.0
    %378 = vmatpush1.msra.mxu0 0.0
    %379 = vmatprep.subr.mxu0 0.0
    %380 = vmatpush1.msra.mxu0 0.0
    %381 = vmatprep.subr.mxu0 0.0
    %382 = vmatpush1.msra.mxu0 0.0
    %383 = vmatprep.subr.mxu0 0.0
    %384 = vmatpush1.msra.mxu0 0.0
    %385 = vmatprep.subr.mxu0 0.0
    %386 = vmatpush1.msra.mxu0 0.0
    %387 = vmatprep.subr.mxu0 0.0
    %388 = vmatpush1.msra.mxu0 0.0
    %389 = vmatprep.subr.mxu0 0.0
    %390 = vmatpush1.msra.mxu0 0.0
    %391 = vmatprep.subr.mxu0 0.0
    %392 = vmatpush1.msra.mxu0 0.0
    %393 = vmatprep.subr.mxu0 0.0
    %394 = vmatpush1.msra.mxu0 0.0
    %395 = vmatprep.subr.mxu0 0.0
    %396 = vmatpush1.msra.mxu0 0.0
    %397 = vmatprep.subr.mxu0 0.0
    %398 = vmatpush1.msra.mxu0 0.0
    %399 = vmatprep.subr.mxu0 0.0
    %400 = vmatpush1.msra.mxu0 0.0
    %401 = vmatprep.subr.mxu0 0.0
    %402 = vmatpush1.msra.mxu0 %v369
    %403 = vmatprep.subr.mxu0 0.0
    %404 = vmatpush2.msra.mxu0 0.0
    %405 = vmatprep.subr.mxu0 0.0
    %406 = vmatpush2.msra.mxu0 0.0
    %407 = vmatprep.subr.mxu0 0.0
    %408 = vmatpush2.msra.mxu0 0.0
    %409 = vmatprep.subr.mxu0 0.0
    %410 = vmatpush2.msra.mxu0 0.0
    %411 = vmatprep.subr.mxu0 0.0
    %412 = vmatpush2.msra.mxu0 0.0
    %413 = vmatprep.subr.mxu0 0.0
    %414 = vmatpush2.msra.mxu0 0.0
    %415 = vmatprep.subr.mxu0 0.0
    %416 = vmatpush2.msra.mxu0 0.0
    %417 = vmatprep.subr.mxu0 0.0
    %418 = vmatpush2.msra.mxu0 0.0
    %419 = vmatprep.subr.mxu0 0.0
    %420 = vmatpush2.msra.mxu0 0.0
    %421 = vmatprep.subr.mxu0 0.0
    %422 = vmatpush2.msra.mxu0 0.0
    %423 = vmatprep.subr.mxu0 0.0
    %424 = vmatpush2.msra.mxu0 0.0
    %425 = vmatprep.subr.mxu0 0.0
    %426 = vmatpush2.msra.mxu0 0.0
    %427 = vmatprep.subr.mxu0 0.0
    %428 = vmatpush2.msra.mxu0 0.0
    %429 = vmatprep.subr.mxu0 0.0
    %430 = vmatpush2.msra.mxu0 0.0
    %431 = vmatprep.subr.mxu0 0.0
    %432 = vmatpush2.msra.mxu0 0.0
    %433 = vmatprep.subr.mxu0 0.0
    %434 = vmatpush2.msra.mxu0 0.0
    %435 = vmatprep.mubr.f32.mxu0 0.0
    %436 = vmatmul.mubr.f32.gmra.mxu0 %v365
    %v437 = vpop.f32.mrf.mxu0
    %v438 = vadd.f32 0.0, %v437
    %v439 = vpop.f32.mrf.mxu0
    %440 = vdwg.mxu0
    %v441 = vmul.f32 %v362, %v438
    %vm442 = vcmask 523264
    %v444 = vsel %vm442, %v441, 0
    %446 = vmatprep.subr.mxu0 0.0
    %447 = vmatpush1.msra.mxu0 0.0
    %448 = vmatprep.subr.mxu0 0.0
    %449 = vmatpush1.msra.mxu0 0.0
    %450 = vmatprep.subr.mxu0 0.0
    %451 = vmatpush1.msra.mxu0 0.0
    %452 = vmatprep.subr.mxu0 0.0
    %453 = vmatpush1.msra.mxu0 0.0
    %454 = vmatprep.subr.mxu0 0.0
    %455 = vmatpush1.msra.mxu0 0.0
    %456 = vmatprep.subr.mxu0 0.0
    %457 = vmatpush1.msra.mxu0 0.0
    %458 = vmatprep.subr.mxu0 0.0
    %459 = vmatpush1.msra.mxu0 0.0
    %460 = vmatprep.subr.mxu0 0.0
    %461 = vmatpush1.msra.mxu0 0.0
    %462 = vmatprep.subr.mxu0 0.0
    %463 = vmatpush1.msra.mxu0 %v87
    %464 = vmatprep.subr.mxu0 0.0
    %465 = vmatpush1.msra.mxu0 %v86
    %466 = vmatprep.subr.mxu0 0.0
    %467 = vmatpush1.msra.mxu0 %v85
    %468 = vmatprep.subr.mxu0 0.0
    %469 = vmatpush1.msra.mxu0 %v84
    %470 = vmatprep.subr.mxu0 0.0
    %471 = vmatpush1.msra.mxu0 %v83
    %472 = vmatprep.subr.mxu0 0.0
    %473 = vmatpush1.msra.mxu0 %v82
    %474 = vmatprep.subr.mxu0 0.0
    %475 = vmatpush1.msra.mxu0 %v81
    %476 = vmatprep.subr.mxu0 0.0
    %477 = vmatpush1.msra.mxu0 %v80
    %478 = vmatprep.subr.mxu0 0.0
    %479 = vmatpush2.msra.mxu0 0.0
    %480 = vmatprep.subr.mxu0 0.0
    %481 = vmatpush2.msra.mxu0 0.0
    %482 = vmatprep.subr.mxu0 0.0
    %483 = vmatpush2.msra.mxu0 0.0
    %484 = vmatprep.subr.mxu0 0.0
    %485 = vmatpush2.msra.mxu0 0.0
    %486 = vmatprep.subr.mxu0 0.0
    %487 = vmatpush2.msra.mxu0 0.0
    %488 = vmatprep.subr.mxu0 0.0
    %489 = vmatpush2.msra.mxu0 0.0
    %490 = vmatprep.subr.mxu0 0.0
    %491 = vmatpush2.msra.mxu0 0.0
    %492 = vmatprep.subr.mxu0 0.0
    %493 = vmatpush2.msra.mxu0 0.0
    %494 = vmatprep.subr.mxu0 0.0
    %495 = vmatpush2.msra.mxu0 0.0
    %496 = vmatprep.subr.mxu0 0.0
    %497 = vmatpush2.msra.mxu0 0.0
    %498 = vmatprep.subr.mxu0 0.0
    %499 = vmatpush2.msra.mxu0 0.0
    %500 = vmatprep.subr.mxu0 0.0
    %501 = vmatpush2.msra.mxu0 0.0
    %502 = vmatprep.subr.mxu0 0.0
    %503 = vmatpush2.msra.mxu0 0.0
    %504 = vmatprep.subr.mxu0 0.0
    %505 = vmatpush2.msra.mxu0 0.0
    %506 = vmatprep.subr.mxu0 0.0
    %507 = vmatpush2.msra.mxu0 0.0
    %508 = vmatprep.subr.mxu0 0.0
    %509 = vmatpush2.msra.mxu0 0.0
    %510 = vmatprep.mubr.f32.mxu0 0.0
    %511 = vmatmul.mubr.f32.gmra.mxu0 %v444
    %v512 = vpop.f32.mrf.mxu0
    %v513 = vadd.f32 0.0, %v512
    %v514 = vpop.f32.mrf.mxu0
    %515 = vdwg.mxu0
    %v516 = vadd.f32 %v111, %v513
    %v517 = vmul.f32 %v516, 0.5
    %v518 = vadd.f32 %v109, %v517
  $region58: #{cde_forward_pallas.1} parent=0 // loop_footer
    %s108 = sadd.s32 1, %s104
  $region59: #{cde_forward_pallas.1} parent=0 // loop_footer_branch
    %103 = sbr.rel target = $region55
  $region60: #{cde_forward_pallas.1} parent=0 // loop_exit
    _
  %vm519 = vcmask 125952
  %520 = vst.msk [vmem:[#allocation2] sm:$0xf] %vm519, %v109
  %521 = vst.msk [vmem:[#allocation3] sm:$0xf] %vm519, %v110
  %522 = vst.msk [vmem:[#allocation4] sm:$0xf] %vm519, %v111
  // Predicated region
  $region61: #{cde_forward_pallas.1} parent=0 // pred_check
    %p523 = pneg %p88
  $region62: #{cde_forward_pallas.1} parent=0 // pred_check_branch
    %525 = sbr.rel (%p523) target = $region64
  $region63: #{cde_forward_pallas.1} parent=0 // pred_region
    %526 = vst.msk [vmem:[%s12] sm:$0xf] %vm519, %v109
  $region64: #{cde_forward_pallas.1} parent=0 // pred_fallthru
    _
  // Predicated region
  $region65: #{cde_forward_pallas.1} parent=0 // pred_check
    _
  $region66: #{cde_forward_pallas.1} parent=0 // pred_check_branch
    %528 = sbr.rel (0) target = $region68
  $region67: #{cde_forward_pallas.1} parent=0 // pred_region
    _
  $region68: #{cde_forward_pallas.1} parent=0 // pred_fallthru
    _
  // Predicated region
  $region69: #{cde_forward_pallas.1} parent=0 // pred_check
    _
  $region70: #{cde_forward_pallas.1} parent=0 // pred_check_branch
    %530 = sbr.rel (0) target = $region72
  $region71: #{cde_forward_pallas.1} parent=0 // pred_region
    _
  $region72: #{cde_forward_pallas.1} parent=0 // pred_fallthru
    _

</llo_original>
